<compile_context>
chip_gen: v5e
topology: v5e:2x2
jax: 0.10.0
libtpu: 0.0.40
codegen_flags: <defaults>
</compile_context>

<pallas_src>
import functools

import jax
import jax.numpy as jnp
from jax import lax
from jax.experimental import pallas as pl
from jax.experimental.pallas import tpu as pltpu


def _round_up(x: int, m: int) -> int:
    return ((x + m - 1) // m) * m


def read_layer_kernel(x_ref, w1_ref, b1_ref, w2_ref, b2_ref, o_ref, *, n_valid):
    tile = o_ref.shape[-1]
    # fc1 + relu: MXU matmul (bf16 or f32 inputs), f32 accumulation; VPU bias/relu.
    h1 = jnp.dot(x_ref[...], w1_ref[...], preferred_element_type=jnp.float32)
    h1 = jnp.maximum(h1 + b1_ref[...], 0.0)                       # (tile, H) f32
    # fc2 (output width 1): contract the hidden dim of h1 against the w2 row so
    # the result lands directly as a lane-dense (1, tile) row -> unmasked full-lane
    # stores instead of tile/8 masked vst.msk (the biggest single lever here).
    h2 = lax.dot_general(
        w2_ref[...], h1,
        dimension_numbers=(((1,), (1,)), ((), ())),
        preferred_element_type=jnp.float32,
    )                                                             # (1, tile) f32
    h2 = h2 + b2_ref[0]
    # Zero rows that only exist because of padding, so the padded output slab is
    # safe to reduce over / alias (not just safe after the wrapper slice).
    node_idx = pl.program_id(0) * tile + lax.broadcasted_iota(jnp.int32, (1, tile), 1)
    h2 = jnp.where(node_idx < n_valid, h2, 0.0)
    o_ref[...] = h2.astype(o_ref.dtype)


def read_layer(x, w1, b1, w2_row, b2, *, tile_n=1024, use_bf16=True):
    """x: [N, dim_in] node features -> [N, 1] readout.

    w1: [dim_in, dim_hidden], b1: [1, dim_hidden],
    w2_row: [1, dim_hidden] (fc2 weight as a row), b2: [1] scalar.
    """
    N, dim_in = x.shape
    dim_hidden = w1.shape[1]
    assert w1.shape == (dim_in, dim_hidden)
    assert b1.shape == (1, dim_hidden)
    assert w2_row.shape == (1, dim_hidden)
    assert b2.shape == (1,)

    out_dtype = x.dtype

    # bf16 MXU inputs halve the HBM read for x (the kernel is read-bound on x).
    # Bias / relu / fc2 stay in f32.
    if use_bf16:
        x_in = x.astype(jnp.bfloat16)
        w1_in = w1.astype(jnp.bfloat16)
    else:
        x_in = x
        w1_in = w1
    b1_in = b1.astype(jnp.float32)
    w2_in = w2_row.astype(jnp.float32)
    b2_in = b2.astype(jnp.float32)

    # Node tiling. tile is a multiple of 128 so the (1, tile) output block is fully
    # lane-dense and the (8,128) BlockSpec rule is trivially satisfied.
    n_rows = _round_up(N, 128)
    tile = max(128, min(_round_up(tile_n, 128), n_rows))
    # v7x has 2 TensorCores: make sure a big problem yields >= 2 "parallel" grid
    # steps so the second core has work. Extra steps are ~0.35 us on 1-TC chips.
    if n_rows >= 1024 and n_rows // tile < 2:
        tile = _round_up(pl.cdiv(n_rows, 2), 128)
    n_pad = _round_up(N, tile)

    if n_pad != N:
        x_in = jnp.pad(x_in, ((0, n_pad - N), (0, 0)))

    grid = (n_pad // tile,)

    kernel = functools.partial(read_layer_kernel, n_valid=N)

    out_row = pl.pallas_call(
        kernel,
        out_shape=jax.ShapeDtypeStruct((1, n_pad), out_dtype),
        grid_spec=pltpu.PrefetchScalarGridSpec(
            num_scalar_prefetch=0,
            grid=grid,
            in_specs=[
                # x tile: the only HBM-bound stream. (If small-tile runs ever show
                # exposed DMA, add pipeline_mode=pl.Buffered(3) here.)
                pl.BlockSpec((tile, dim_in), lambda i: (i, 0)),
                pl.BlockSpec((dim_in, dim_hidden), lambda i: (0, 0)),  # W1 (resident)
                pl.BlockSpec((1, dim_hidden), lambda i: (0, 0)),       # b1
                pl.BlockSpec((1, dim_hidden), lambda i: (0, 0)),       # w2 row
                pl.BlockSpec(memory_space=pltpu.MemorySpace.SMEM),     # b2 scalar
            ],
            # Lane-dense output row per grid step (unmasked full-lane stores).
            out_specs=pl.BlockSpec((1, tile), lambda i: (0, i)),
        ),
        compiler_params=pltpu.CompilerParams(
            # Disjoint node tiles -> megacore-shardable on v7x.
            # (pltpu.CORE_PARALLEL is a possible v7x-specific experiment here.)
            dimension_semantics=("parallel",),
        ),
    )(x_in, w1_in, b1_in, w2_in, b2_in)

    out = out_row.reshape(n_pad, 1)
    return out[:N] if n_pad != N else out


def reference(x, w1, b1, w2_row, b2):
    h1 = jnp.maximum(x @ w1 + b1, 0.0)
    return h1 @ w2_row.T + b2[0]


if __name__ == "__main__":
    # Node-feature matrix consistent with the module: N nodes, dim_in -> dim_hidden -> 1.
    N, dim_in, dim_hidden = 600, 32, 32

    key = jax.random.PRNGKey(0)
    kx, kw1, kb1, kw2, kb2 = jax.random.split(key, 5)

    x = jax.random.normal(kx, (N, dim_in), dtype=jnp.float32)
    w1 = jax.random.normal(kw1, (dim_in, dim_hidden), dtype=jnp.float32) * 0.1
    b1 = jax.random.normal(kb1, (1, dim_hidden), dtype=jnp.float32) * 0.1
    w2_row = jax.random.normal(kw2, (1, dim_hidden), dtype=jnp.float32) * 0.1
    b2 = jax.random.normal(kb2, (1,), dtype=jnp.float32) * 0.1

    ref = reference(x, w1, b1, w2_row, b2)

    # 1) Exact f32 path (single lane-dense tile).
    out_f32 = jax.block_until_ready(read_layer(x, w1, b1, w2_row, b2, use_bf16=False))
    assert out_f32.shape == (N, 1)
    assert jnp.allclose(out_f32, ref, atol=1e-3, rtol=1e-3)

    # 2) Default perf path: bf16 MXU inputs.
    out_bf16 = jax.block_until_ready(read_layer(x, w1, b1, w2_row, b2))
    assert out_bf16.shape == (N, 1)
    assert jnp.allclose(out_bf16, ref, atol=5e-2, rtol=5e-2)

    # 3) Multi-step grid + row-padding path (N not a multiple of the tile).
    out_tiled = jax.block_until_ready(read_layer(x, w1, b1, w2_row, b2, tile_n=256))
    assert out_tiled.shape == (N, 1)
    assert jnp.allclose(out_tiled, ref, atol=5e-2, rtol=5e-2)

    # TODO(synk): dgl graph plumbing (g.apply_nodes) has no Pallas equivalent;
    # the kernel implements the node-wise linear_trans hot path on the packed
    # node-feature matrix.
    print("KERNEL_OK")
</pallas_src>

<mosaic_0001>
module attributes {stable_mosaic.version = 11 : i64} {
  func.func @read_layer_kernel(%arg0: i32, %arg1: memref<640x32xf32, #tpu.memory_space<vmem>>, %arg2: memref<32x32xf32, #tpu.memory_space<vmem>>, %arg3: memref<1x32xf32, #tpu.memory_space<vmem>>, %arg4: memref<1x32xf32, #tpu.memory_space<vmem>>, %arg5: memref<1xf32, #tpu.memory_space<smem>>, %arg6: memref<1x640xf32, #tpu.memory_space<vmem>>) attributes {dimension_semantics = [#tpu.dimension_semantics<parallel>], iteration_bounds = array<i64: 1>, scalar_prefetch = 0 : i64, scratch_operands = 0 : i64, tpu.core_type = #tpu.core_type<tc>, window_params = [{transform_indices = @transform_0, window_bounds = array<i64: 640, 32>}, {pipeline_mode = #tpu.pipeline_mode<synchronous>, transform_indices = @transform_1, window_bounds = array<i64: 32, 32>}, {pipeline_mode = #tpu.pipeline_mode<synchronous>, transform_indices = @transform_2, window_bounds = array<i64: 1, 32>}, {pipeline_mode = #tpu.pipeline_mode<synchronous>, transform_indices = @transform_3, window_bounds = array<i64: 1, 32>}, {transform_indices = @transform_4, window_bounds = array<i64: 1>}, {transform_indices = @transform_5, window_bounds = array<i64: 1, 640>}]} {
    %c0 = arith.constant 0 : index
    %c0_0 = arith.constant 0 : index
    %0 = vector.load %arg1[%c0, %c0_0] : memref<640x32xf32, #tpu.memory_space<vmem>>, vector<640x32xf32>
    %c0_1 = arith.constant 0 : index
    %c0_2 = arith.constant 0 : index
    %1 = vector.load %arg2[%c0_1, %c0_2] : memref<32x32xf32, #tpu.memory_space<vmem>>, vector<32x32xf32>
    %cst = arith.constant dense<0.000000e+00> : vector<640x32xf32>
    %2 = tpu.matmul %0, %1, %cst {dimension_numbers = #tpu.dot_dimension_numbers<[1], [0], [0], [1], [0, 0, 1, 1], [], []>} : vector<640x32xf32>, vector<32x32xf32>, vector<640x32xf32> -> vector<640x32xf32>
    %c0_3 = arith.constant 0 : index
    %c0_4 = arith.constant 0 : index
    %3 = vector.load %arg3[%c0_3, %c0_4] : memref<1x32xf32, #tpu.memory_space<vmem>>, vector<1x32xf32>
    %4 = vector.broadcast %3 : vector<1x32xf32> to vector<640x32xf32>
    %5 = arith.addf %2, %4 : vector<640x32xf32>
    %cst_5 = arith.constant 0.000000e+00 : f32
    %6 = vector.broadcast %cst_5 : f32 to vector<640x32xf32>
    %7 = arith.maximumf %5, %6 : vector<640x32xf32>
    %c0_6 = arith.constant 0 : index
    %c0_7 = arith.constant 0 : index
    %8 = vector.load %arg4[%c0_6, %c0_7] : memref<1x32xf32, #tpu.memory_space<vmem>>, vector<1x32xf32>
    %cst_8 = arith.constant dense<0.000000e+00> : vector<1x640xf32>
    %9 = tpu.matmul %8, %7, %cst_8 {dimension_numbers = #tpu.dot_dimension_numbers<[1], [1], [0], [0], [0, 0, 1, 0], [], []>} : vector<1x32xf32>, vector<640x32xf32>, vector<1x640xf32> -> vector<1x640xf32>
    %c0_9 = arith.constant 0 : index
    %10 = memref.load %arg5[%c0_9] : memref<1xf32, #tpu.memory_space<smem>>
    %11 = vector.broadcast %10 : f32 to vector<1x640xf32>
    %12 = arith.addf %9, %11 : vector<1x640xf32>
    %c640_i32 = arith.constant 640 : i32
    %13 = arith.muli %arg0, %c640_i32 : i32
    %14 = tpu.iota {dimensions = array<i32: 1>} : vector<1x640xi32>
    %15 = vector.broadcast %13 : i32 to vector<1x640xi32>
    %16 = arith.addi %15, %14 : vector<1x640xi32>
    %c600_i32 = arith.constant 600 : i32
    %17 = vector.broadcast %c600_i32 : i32 to vector<1x640xi32>
    %18 = arith.cmpi slt, %16, %17 : vector<1x640xi32>
    %cst_10 = arith.constant 0.000000e+00 : f32
    %19 = vector.broadcast %cst_10 : f32 to vector<1x640xf32>
    %20 = arith.select %18, %12, %19 : vector<1x640xi1>, vector<1x640xf32>
    %c0_11 = arith.constant 0 : index
    %c0_12 = arith.constant 0 : index
    %21 = vector.load %arg6[%c0_11, %c0_12] : memref<1x640xf32, #tpu.memory_space<vmem>>, vector<1x640xf32>
    tpu.vector_store %arg6[%c0_11, %c0_12], %20 {strides = array<i32>} : memref<1x640xf32, #tpu.memory_space<vmem>>, vector<1x640xf32>,
    return
  }
  func.func @transform_0(%arg0: i32) -> (i32, i32) {
    %c0_i32 = arith.constant 0 : i32
    %c0_i32_0 = arith.constant 0 : i32
    return %arg0, %c0_i32 : i32, i32
  }
  func.func @transform_1(%arg0: i32) -> (i32, i32) {
    %c0_i32 = arith.constant 0 : i32
    %c0_i32_0 = arith.constant 0 : i32
    %c0_i32_1 = arith.constant 0 : i32
    return %c0_i32, %c0_i32_0 : i32, i32
  }
  func.func @transform_2(%arg0: i32) -> (i32, i32) {
    %c0_i32 = arith.constant 0 : i32
    %c0_i32_0 = arith.constant 0 : i32
    %c0_i32_1 = arith.constant 0 : i32
    return %c0_i32, %c0_i32_0 : i32, i32
  }
  func.func @transform_3(%arg0: i32) -> (i32, i32) {
    %c0_i32 = arith.constant 0 : i32
    %c0_i32_0 = arith.constant 0 : i32
    %c0_i32_1 = arith.constant 0 : i32
    return %c0_i32, %c0_i32_0 : i32, i32
  }
  func.func @transform_4(%arg0: i32) -> i32 {
    %c0_i32 = arith.constant 0 : i32
    %c0_i32_0 = arith.constant 0 : i32
    return %c0_i32 : i32
  }
  func.func @transform_5(%arg0: i32) -> (i32, i32) {
    %c0_i32 = arith.constant 0 : i32
    %c0_i32_0 = arith.constant 0 : i32
    return %c0_i32, %arg0 : i32, i32
  }
}

</mosaic_0001>

<llo_original>
// kernel: tpu_custom_call.1
$region0: #{tpu_custom_call.1}
  #allocation0 [shape = 'u32[]', space=smem, size = 0x4, offset = 0x4, fixed_abs, tag = 'smem constant byte address 0x4 - core index']
  #allocation1 [shape = 'u32[72,128]{1,0:T(1,128)}', space=vmem, size = 0x9000, scoped, tag = 'internal scratch']
  #allocation2 [shape = 'f32[1]{0:T(128)S(6)}', space=smem, size = 0x200, scoped, tag = 'scoped memory for tpu_custom_call.1']
  %s0 = inlined_call_operand.vmem [shape: f32[640,32], index: 0, kind: input, shape index: {}]
  %s1 = inlined_call_operand.vmem [shape: f32[32,32], index: 1, kind: input, shape index: {}]
  %s2 = inlined_call_operand.vmem [shape: f32[1,32], index: 2, kind: input, shape index: {}]
  %s3 = inlined_call_operand.vmem [shape: f32[1,32], index: 3, kind: input, shape index: {}]
  %s4 = inlined_call_operand.<no memory space> [shape: f32[1], index: 4, kind: input, shape index: {}]
  %s5 = inlined_call_operand.hbm [shape: f32[1,640], index: 5, kind: output, shape index: {}]
  %s6 = sld [smem:[#allocation0]]
  $region30: #{tpu_custom_call.1} parent=0
    _
  %s8 = ssub.s32 1, %s6
  %s9 = scalar_select 0, %s8, %s6
  %10 = sst [smem:[#allocation2]] %s4
  $region1: #{tpu_custom_call.1} parent=0
    #allocation3 [shape = 'u8[2560]{0}', space=vmem, size = 0xc00, scoped, tag = 'output window, operand 0, single buffered']
    #allocation4 [shape = 's32[1]{0}', space=sflag, size = 0x4, scoped, tag = 'scoped memory for tpu_custom_call.1']
    %11 = vsyncpa [#allocation4], 0
    // Predicated region
    $region2: #{tpu_custom_call.1} parent=1 // pred_check
      _
    $region3: #{tpu_custom_call.1} parent=1 // pred_check_branch
      %13 = sbr.rel (0) target = $region5
    $region4: #{tpu_custom_call.1} parent=1 // pred_region
      _
    $region5: #{tpu_custom_call.1} parent=1 // pred_fallthru
      _
    // Predicated region
    $region6: #{tpu_custom_call.1} parent=1 // pred_check
      _
    $region7: #{tpu_custom_call.1} parent=1 // pred_check_branch
      %15 = sbr.rel (0) target = $region9
    $region8: #{tpu_custom_call.1} parent=1 // pred_region
      _
    $region9: #{tpu_custom_call.1} parent=1 // pred_fallthru
      _
    // Predicated region
    $region10: #{tpu_custom_call.1} parent=1 // pred_check
      _
    $region11: #{tpu_custom_call.1} parent=1 // pred_check_branch
      %17 = sbr.rel (0) target = $region13
    $region12: #{tpu_custom_call.1} parent=1 // pred_region
      _
    $region13: #{tpu_custom_call.1} parent=1 // pred_fallthru
      _
    // Predicated region
    $region14: #{tpu_custom_call.1} parent=1 // pred_check
      _
    $region15: #{tpu_custom_call.1} parent=1 // pred_check_branch
      %19 = sbr.rel (0) target = $region17
    $region16: #{tpu_custom_call.1} parent=1 // pred_region
      _
    $region17: #{tpu_custom_call.1} parent=1 // pred_fallthru
      _
    // Predicated region
    $region18: #{tpu_custom_call.1} parent=1 // pred_check
      _
    $region19: #{tpu_custom_call.1} parent=1 // pred_check_branch
      %21 = sbr.rel (0) target = $region21
    $region20: #{tpu_custom_call.1} parent=1 // pred_region
      _
    $region21: #{tpu_custom_call.1} parent=1 // pred_fallthru
      _
    %v22 = vld [vmem:[%s0] sm:$0xff]
    %v23 = vld [vmem:[%s0 + $0x8] sm:$0xff]
    %v24 = vld [vmem:[%s0 + $0x10] sm:$0xff]
    %v25 = vld [vmem:[%s0 + $0x18] sm:$0xff]
    %v26 = vld [vmem:[%s0 + $0x20] sm:$0xff]
    %v27 = vld [vmem:[%s0 + $0x28] sm:$0xff]
    %v28 = vld [vmem:[%s0 + $0x30] sm:$0xff]
    %v29 = vld [vmem:[%s0 + $0x38] sm:$0xff]
    %v30 = vld [vmem:[%s0 + $0x40] sm:$0xff]
    %v31 = vld [vmem:[%s0 + $0x48] sm:$0xff]
    %v32 = vld [vmem:[%s0 + $0x50] sm:$0xff]
    %v33 = vld [vmem:[%s0 + $0x58] sm:$0xff]
    %v34 = vld [vmem:[%s0 + $0x60] sm:$0xff]
    %v35 = vld [vmem:[%s0 + $0x68] sm:$0xff]
    %v36 = vld [vmem:[%s0 + $0x70] sm:$0xff]
    %v37 = vld [vmem:[%s0 + $0x78] sm:$0xff]
    %v38 = vld [vmem:[%s0 + $0x80] sm:$0xff]
    %v39 = vld [vmem:[%s0 + $0x88] sm:$0xff]
    %v40 = vld [vmem:[%s0 + $0x90] sm:$0xff]
    %v41 = vld [vmem:[%s0 + $0x98] sm:$0xff]
    %v42 = vld [vmem:[%s0 + $0xa0] sm:$0xff]
    %v43 = vld [vmem:[%s0 + $0xa8] sm:$0xff]
    %v44 = vld [vmem:[%s0 + $0xb0] sm:$0xff]
    %v45 = vld [vmem:[%s0 + $0xb8] sm:$0xff]
    %v46 = vld [vmem:[%s0 + $0xc0] sm:$0xff]
    %v47 = vld [vmem:[%s0 + $0xc8] sm:$0xff]
    %v48 = vld [vmem:[%s0 + $0xd0] sm:$0xff]
    %v49 = vld [vmem:[%s0 + $0xd8] sm:$0xff]
    %v50 = vld [vmem:[%s0 + $0xe0] sm:$0xff]
    %v51 = vld [vmem:[%s0 + $0xe8] sm:$0xff]
    %v52 = vld [vmem:[%s0 + $0xf0] sm:$0xff]
    %v53 = vld [vmem:[%s0 + $0xf8] sm:$0xff]
    %v54 = vld [vmem:[%s0 + $0x100] sm:$0xff]
    %v55 = vld [vmem:[%s0 + $0x108] sm:$0xff]
    %v56 = vld [vmem:[%s0 + $0x110] sm:$0xff]
    %v57 = vld [vmem:[%s0 + $0x118] sm:$0xff]
    %v58 = vld [vmem:[%s0 + $0x120] sm:$0xff]
    %v59 = vld [vmem:[%s0 + $0x128] sm:$0xff]
    %v60 = vld [vmem:[%s0 + $0x130] sm:$0xff]
    %v61 = vld [vmem:[%s0 + $0x138] sm:$0xff]
    %v62 = vld [vmem:[%s0 + $0x140] sm:$0xff]
    %v63 = vld [vmem:[%s0 + $0x148] sm:$0xff]
    %v64 = vld [vmem:[%s0 + $0x150] sm:$0xff]
    %v65 = vld [vmem:[%s0 + $0x158] sm:$0xff]
    %v66 = vld [vmem:[%s0 + $0x160] sm:$0xff]
    %v67 = vld [vmem:[%s0 + $0x168] sm:$0xff]
    %v68 = vld [vmem:[%s0 + $0x170] sm:$0xff]
    %v69 = vld [vmem:[%s0 + $0x178] sm:$0xff]
    %v70 = vld [vmem:[%s0 + $0x180] sm:$0xff]
    %v71 = vld [vmem:[%s0 + $0x188] sm:$0xff]
    %v72 = vld [vmem:[%s0 + $0x190] sm:$0xff]
    %v73 = vld [vmem:[%s0 + $0x198] sm:$0xff]
    %v74 = vld [vmem:[%s0 + $0x1a0] sm:$0xff]
    %v75 = vld [vmem:[%s0 + $0x1a8] sm:$0xff]
    %v76 = vld [vmem:[%s0 + $0x1b0] sm:$0xff]
    %v77 = vld [vmem:[%s0 + $0x1b8] sm:$0xff]
    %v78 = vld [vmem:[%s0 + $0x1c0] sm:$0xff]
    %v79 = vld [vmem:[%s0 + $0x1c8] sm:$0xff]
    %v80 = vld [vmem:[%s0 + $0x1d0] sm:$0xff]
    %v81 = vld [vmem:[%s0 + $0x1d8] sm:$0xff]
    %v82 = vld [vmem:[%s0 + $0x1e0] sm:$0xff]
    %v83 = vld [vmem:[%s0 + $0x1e8] sm:$0xff]
    %v84 = vld [vmem:[%s0 + $0x1f0] sm:$0xff]
    %v85 = vld [vmem:[%s0 + $0x1f8] sm:$0xff]
    %v86 = vld [vmem:[%s0 + $0x200] sm:$0xff]
    %v87 = vld [vmem:[%s0 + $0x208] sm:$0xff]
    %v88 = vld [vmem:[%s0 + $0x210] sm:$0xff]
    %v89 = vld [vmem:[%s0 + $0x218] sm:$0xff]
    %v90 = vld [vmem:[%s0 + $0x220] sm:$0xff]
    %v91 = vld [vmem:[%s0 + $0x228] sm:$0xff]
    %v92 = vld [vmem:[%s0 + $0x230] sm:$0xff]
    %v93 = vld [vmem:[%s0 + $0x238] sm:$0xff]
    %v94 = vld [vmem:[%s0 + $0x240] sm:$0xff]
    %v95 = vld [vmem:[%s0 + $0x248] sm:$0xff]
    %v96 = vld [vmem:[%s0 + $0x250] sm:$0xff]
    %v97 = vld [vmem:[%s0 + $0x258] sm:$0xff]
    %v98 = vld [vmem:[%s0 + $0x260] sm:$0xff]
    %v99 = vld [vmem:[%s0 + $0x268] sm:$0xff]
    %v100 = vld [vmem:[%s0 + $0x270] sm:$0xff]
    %v101 = vld [vmem:[%s0 + $0x278] sm:$0xff]
    %v102 = vld [vmem:[%s1] sm:$0xff]
    %v103 = vld [vmem:[%s1 + $0x8] sm:$0xff]
    %v104 = vld [vmem:[%s1 + $0x10] sm:$0xff]
    %v105 = vld [vmem:[%s1 + $0x18] sm:$0xff]
    %v106 = vld [vmem:[%s2] sm:$0x1]
    %v108 = vperm.slane %v106, 0
    %vm110 = vcmask 261120
    %v112 = vsel %vm110, %v22, 0
    %v115 = vsel %vm110, %v23, 0
    %v118 = vsel %vm110, %v24, 0
    %v121 = vsel %vm110, %v25, 0
    %v124 = vsel %vm110, %v26, 0
    %v127 = vsel %vm110, %v27, 0
    %v130 = vsel %vm110, %v28, 0
    %v133 = vsel %vm110, %v29, 0
    %v136 = vsel %vm110, %v30, 0
    %v139 = vsel %vm110, %v31, 0
    %v142 = vsel %vm110, %v32, 0
    %v145 = vsel %vm110, %v33, 0
    %v148 = vsel %vm110, %v34, 0
    %v151 = vsel %vm110, %v35, 0
    %v154 = vsel %vm110, %v36, 0
    %v157 = vsel %vm110, %v37, 0
    %v160 = vsel %vm110, %v38, 0
    %v163 = vsel %vm110, %v39, 0
    %v166 = vsel %vm110, %v40, 0
    %v169 = vsel %vm110, %v41, 0
    %v172 = vsel %vm110, %v42, 0
    %v175 = vsel %vm110, %v43, 0
    %v178 = vsel %vm110, %v44, 0
    %v181 = vsel %vm110, %v45, 0
    %v184 = vsel %vm110, %v46, 0
    %v187 = vsel %vm110, %v47, 0
    %v190 = vsel %vm110, %v48, 0
    %v193 = vsel %vm110, %v49, 0
    %v196 = vsel %vm110, %v50, 0
    %v199 = vsel %vm110, %v51, 0
    %v202 = vsel %vm110, %v52, 0
    %v205 = vsel %vm110, %v53, 0
    %v208 = vsel %vm110, %v54, 0
    %v211 = vsel %vm110, %v55, 0
    %v214 = vsel %vm110, %v56, 0
    %v217 = vsel %vm110, %v57, 0
    %v220 = vsel %vm110, %v58, 0
    %v223 = vsel %vm110, %v59, 0
    %v226 = vsel %vm110, %v60, 0
    %v229 = vsel %vm110, %v61, 0
    %v232 = vsel %vm110, %v62, 0
    %v235 = vsel %vm110, %v63, 0
    %v238 = vsel %vm110, %v64, 0
    %v241 = vsel %vm110, %v65, 0
    %v244 = vsel %vm110, %v66, 0
    %v247 = vsel %vm110, %v67, 0
    %v250 = vsel %vm110, %v68, 0
    %v253 = vsel %vm110, %v69, 0
    %v256 = vsel %vm110, %v70, 0
    %v259 = vsel %vm110, %v71, 0
    %v262 = vsel %vm110, %v72, 0
    %v265 = vsel %vm110, %v73, 0
    %v268 = vsel %vm110, %v74, 0
    %v271 = vsel %vm110, %v75, 0
    %v274 = vsel %vm110, %v76, 0
    %v277 = vsel %vm110, %v77, 0
    %v280 = vsel %vm110, %v78, 0
    %v283 = vsel %vm110, %v79, 0
    %v286 = vsel %vm110, %v80, 0
    %v289 = vsel %vm110, %v81, 0
    %v292 = vsel %vm110, %v82, 0
    %v295 = vsel %vm110, %v83, 0
    %v298 = vsel %vm110, %v84, 0
    %v301 = vsel %vm110, %v85, 0
    %v304 = vsel %vm110, %v86, 0
    %v307 = vsel %vm110, %v87, 0
    %v310 = vsel %vm110, %v88, 0
    %v313 = vsel %vm110, %v89, 0
    %v316 = vsel %vm110, %v90, 0
    %v319 = vsel %vm110, %v91, 0
    %v322 = vsel %vm110, %v92, 0
    %v325 = vsel %vm110, %v93, 0
    %v328 = vsel %vm110, %v94, 0
    %v331 = vsel %vm110, %v95, 0
    %v334 = vsel %vm110, %v96, 0
    %v337 = vsel %vm110, %v97, 0
    %v340 = vsel %vm110, %v98, 0
    %v343 = vsel %vm110, %v99, 0
    %v346 = vsel %vm110, %v100, 0
    %v349 = vsel %vm110, %v101, 0
    %351 = vmatpush.msra.mxu0 0.0
    %352 = vmatpush.msra.mxu0 0.0
    %353 = vmatpush.msra.mxu0 0.0
    %354 = vmatpush.msra.mxu0 0.0
    %355 = vmatpush.msra.mxu0 0.0
    %356 = vmatpush.msra.mxu0 0.0
    %357 = vmatpush.msra.mxu0 0.0
    %358 = vmatpush.msra.mxu0 0.0
    %359 = vmatpush.msra.mxu0 0.0
    %360 = vmatpush.msra.mxu0 0.0
    %361 = vmatpush.msra.mxu0 0.0
    %362 = vmatpush.msra.mxu0 0.0
    %363 = vmatpush.msra.mxu0 %v105
    %364 = vmatpush.msra.mxu0 %v104
    %365 = vmatpush.msra.mxu0 %v103
    %366 = vmatpush.msra.mxu0 %v102
    %367 = vmatmul.f32.gmra.mxu0 %v112
    %v368 = vpop.f32.mrf.mxu0
    %v369 = vadd.f32 %v108, %v368
    %370 = vmatmul.f32.gmra.mxu0 %v115
    %v371 = vpop.f32.mrf.mxu0
    %v372 = vadd.f32 %v108, %v371
    %373 = vmatmul.f32.gmra.mxu0 %v118
    %v374 = vpop.f32.mrf.mxu0
    %v375 = vadd.f32 %v108, %v374
    %376 = vmatmul.f32.gmra.mxu0 %v121
    %v377 = vpop.f32.mrf.mxu0
    %v378 = vadd.f32 %v108, %v377
    %379 = vmatmul.f32.gmra.mxu0 %v124
    %v380 = vpop.f32.mrf.mxu0
    %v381 = vadd.f32 %v108, %v380
    %382 = vmatmul.f32.gmra.mxu0 %v127
    %v383 = vpop.f32.mrf.mxu0
    %v384 = vadd.f32 %v108, %v383
    %385 = vmatmul.f32.gmra.mxu0 %v130
    %v386 = vpop.f32.mrf.mxu0
    %v387 = vadd.f32 %v108, %v386
    %388 = vmatmul.f32.gmra.mxu0 %v133
    %v389 = vpop.f32.mrf.mxu0
    %v390 = vadd.f32 %v108, %v389
    %391 = vmatmul.f32.gmra.mxu0 %v136
    %v392 = vpop.f32.mrf.mxu0
    %v393 = vadd.f32 %v108, %v392
    %394 = vmatmul.f32.gmra.mxu0 %v139
    %v395 = vpop.f32.mrf.mxu0
    %v396 = vadd.f32 %v108, %v395
    %397 = vmatmul.f32.gmra.mxu0 %v142
    %v398 = vpop.f32.mrf.mxu0
    %v399 = vadd.f32 %v108, %v398
    %400 = vmatmul.f32.gmra.mxu0 %v145
    %v401 = vpop.f32.mrf.mxu0
    %v402 = vadd.f32 %v108, %v401
    %403 = vmatmul.f32.gmra.mxu0 %v148
    %v404 = vpop.f32.mrf.mxu0
    %v405 = vadd.f32 %v108, %v404
    %406 = vmatmul.f32.gmra.mxu0 %v151
    %v407 = vpop.f32.mrf.mxu0
    %v408 = vadd.f32 %v108, %v407
    %409 = vmatmul.f32.gmra.mxu0 %v154
    %v410 = vpop.f32.mrf.mxu0
    %v411 = vadd.f32 %v108, %v410
    %412 = vmatmul.f32.gmra.mxu0 %v157
    %v413 = vpop.f32.mrf.mxu0
    %v414 = vadd.f32 %v108, %v413
    %415 = vmatmul.f32.gmra.mxu0 %v160
    %v416 = vpop.f32.mrf.mxu0
    %v417 = vadd.f32 %v108, %v416
    %418 = vmatmul.f32.gmra.mxu0 %v163
    %v419 = vpop.f32.mrf.mxu0
    %v420 = vadd.f32 %v108, %v419
    %421 = vmatmul.f32.gmra.mxu0 %v166
    %v422 = vpop.f32.mrf.mxu0
    %v423 = vadd.f32 %v108, %v422
    %424 = vmatmul.f32.gmra.mxu0 %v169
    %v425 = vpop.f32.mrf.mxu0
    %v426 = vadd.f32 %v108, %v425
    %427 = vmatmul.f32.gmra.mxu0 %v172
    %v428 = vpop.f32.mrf.mxu0
    %v429 = vadd.f32 %v108, %v428
    %430 = vmatmul.f32.gmra.mxu0 %v175
    %v431 = vpop.f32.mrf.mxu0
    %v432 = vadd.f32 %v108, %v431
    %433 = vmatmul.f32.gmra.mxu0 %v178
    %v434 = vpop.f32.mrf.mxu0
    %v435 = vadd.f32 %v108, %v434
    %436 = vmatmul.f32.gmra.mxu0 %v181
    %v437 = vpop.f32.mrf.mxu0
    %v438 = vadd.f32 %v108, %v437
    %439 = vmatmul.f32.gmra.mxu0 %v184
    %v440 = vpop.f32.mrf.mxu0
    %v441 = vadd.f32 %v108, %v440
    %442 = vmatmul.f32.gmra.mxu0 %v187
    %v443 = vpop.f32.mrf.mxu0
    %v444 = vadd.f32 %v108, %v443
    %445 = vmatmul.f32.gmra.mxu0 %v190
    %v446 = vpop.f32.mrf.mxu0
    %v447 = vadd.f32 %v108, %v446
    %448 = vmatmul.f32.gmra.mxu0 %v193
    %v449 = vpop.f32.mrf.mxu0
    %v450 = vadd.f32 %v108, %v449
    %451 = vmatmul.f32.gmra.mxu0 %v196
    %v452 = vpop.f32.mrf.mxu0
    %v453 = vadd.f32 %v108, %v452
    %454 = vmatmul.f32.gmra.mxu0 %v199
    %v455 = vpop.f32.mrf.mxu0
    %v456 = vadd.f32 %v108, %v455
    %457 = vmatmul.f32.gmra.mxu0 %v202
    %v458 = vpop.f32.mrf.mxu0
    %v459 = vadd.f32 %v108, %v458
    %460 = vmatmul.f32.gmra.mxu0 %v205
    %v461 = vpop.f32.mrf.mxu0
    %v462 = vadd.f32 %v108, %v461
    %463 = vmatmul.f32.gmra.mxu0 %v208
    %v464 = vpop.f32.mrf.mxu0
    %v465 = vadd.f32 %v108, %v464
    %466 = vmatmul.f32.gmra.mxu0 %v211
    %v467 = vpop.f32.mrf.mxu0
    %v468 = vadd.f32 %v108, %v467
    %469 = vmatmul.f32.gmra.mxu0 %v214
    %v470 = vpop.f32.mrf.mxu0
    %v471 = vadd.f32 %v108, %v470
    %472 = vmatmul.f32.gmra.mxu0 %v217
    %v473 = vpop.f32.mrf.mxu0
    %v474 = vadd.f32 %v108, %v473
    %475 = vmatmul.f32.gmra.mxu0 %v220
    %v476 = vpop.f32.mrf.mxu0
    %v477 = vadd.f32 %v108, %v476
    %478 = vmatmul.f32.gmra.mxu0 %v223
    %v479 = vpop.f32.mrf.mxu0
    %v480 = vadd.f32 %v108, %v479
    %481 = vmatmul.f32.gmra.mxu0 %v226
    %v482 = vpop.f32.mrf.mxu0
    %v483 = vadd.f32 %v108, %v482
    %484 = vmatmul.f32.gmra.mxu0 %v229
    %v485 = vpop.f32.mrf.mxu0
    %v486 = vadd.f32 %v108, %v485
    %487 = vmatmul.f32.gmra.mxu0 %v232
    %v488 = vpop.f32.mrf.mxu0
    %v489 = vadd.f32 %v108, %v488
    %490 = vmatmul.f32.gmra.mxu0 %v235
    %v491 = vpop.f32.mrf.mxu0
    %v492 = vadd.f32 %v108, %v491
    %493 = vmatmul.f32.gmra.mxu0 %v238
    %v494 = vpop.f32.mrf.mxu0
    %v495 = vadd.f32 %v108, %v494
    %496 = vmatmul.f32.gmra.mxu0 %v241
    %v497 = vpop.f32.mrf.mxu0
    %v498 = vadd.f32 %v108, %v497
    %499 = vmatmul.f32.gmra.mxu0 %v244
    %v500 = vpop.f32.mrf.mxu0
    %v501 = vadd.f32 %v108, %v500
    %502 = vmatmul.f32.gmra.mxu0 %v247
    %v503 = vpop.f32.mrf.mxu0
    %v504 = vadd.f32 %v108, %v503
    %505 = vmatmul.f32.gmra.mxu0 %v250
    %v506 = vpop.f32.mrf.mxu0
    %v507 = vadd.f32 %v108, %v506
    %508 = vmatmul.f32.gmra.mxu0 %v253
    %v509 = vpop.f32.mrf.mxu0
    %v510 = vadd.f32 %v108, %v509
    %511 = vmatmul.f32.gmra.mxu0 %v256
    %v512 = vpop.f32.mrf.mxu0
    %v513 = vadd.f32 %v108, %v512
    %514 = vmatmul.f32.gmra.mxu0 %v259
    %v515 = vpop.f32.mrf.mxu0
    %v516 = vadd.f32 %v108, %v515
    %517 = vmatmul.f32.gmra.mxu0 %v262
    %v518 = vpop.f32.mrf.mxu0
    %v519 = vadd.f32 %v108, %v518
    %520 = vmatmul.f32.gmra.mxu0 %v265
    %v521 = vpop.f32.mrf.mxu0
    %v522 = vadd.f32 %v108, %v521
    %523 = vmatmul.f32.gmra.mxu0 %v268
    %v524 = vpop.f32.mrf.mxu0
    %v525 = vadd.f32 %v108, %v524
    %526 = vmatmul.f32.gmra.mxu0 %v271
    %v527 = vpop.f32.mrf.mxu0
    %v528 = vadd.f32 %v108, %v527
    %529 = vmatmul.f32.gmra.mxu0 %v274
    %v530 = vpop.f32.mrf.mxu0
    %v531 = vadd.f32 %v108, %v530
    %532 = vmatmul.f32.gmra.mxu0 %v277
    %v533 = vpop.f32.mrf.mxu0
    %v534 = vadd.f32 %v108, %v533
    %535 = vmatmul.f32.gmra.mxu0 %v280
    %v536 = vpop.f32.mrf.mxu0
    %v537 = vadd.f32 %v108, %v536
    %538 = vmatmul.f32.gmra.mxu0 %v283
    %v539 = vpop.f32.mrf.mxu0
    %v540 = vadd.f32 %v108, %v539
    %541 = vmatmul.f32.gmra.mxu0 %v286
    %v542 = vpop.f32.mrf.mxu0
    %v543 = vadd.f32 %v108, %v542
    %544 = vmatmul.f32.gmra.mxu0 %v289
    %v545 = vpop.f32.mrf.mxu0
    %v546 = vadd.f32 %v108, %v545
    %547 = vmatmul.f32.gmra.mxu0 %v292
    %v548 = vpop.f32.mrf.mxu0
    %v549 = vadd.f32 %v108, %v548
    %550 = vmatmul.f32.gmra.mxu0 %v295
    %v551 = vpop.f32.mrf.mxu0
    %v552 = vadd.f32 %v108, %v551
    %553 = vmatmul.f32.gmra.mxu0 %v298
    %v554 = vpop.f32.mrf.mxu0
    %v555 = vadd.f32 %v108, %v554
    %556 = vmatmul.f32.gmra.mxu0 %v301
    %v557 = vpop.f32.mrf.mxu0
    %v558 = vadd.f32 %v108, %v557
    %559 = vmatmul.f32.gmra.mxu0 %v304
    %v560 = vpop.f32.mrf.mxu0
    %v561 = vadd.f32 %v108, %v560
    %562 = vmatmul.f32.gmra.mxu0 %v307
    %v563 = vpop.f32.mrf.mxu0
    %v564 = vadd.f32 %v108, %v563
    %565 = vmatmul.f32.gmra.mxu0 %v310
    %v566 = vpop.f32.mrf.mxu0
    %v567 = vadd.f32 %v108, %v566
    %568 = vmatmul.f32.gmra.mxu0 %v313
    %v569 = vpop.f32.mrf.mxu0
    %v570 = vadd.f32 %v108, %v569
    %571 = vmatmul.f32.gmra.mxu0 %v316
    %v572 = vpop.f32.mrf.mxu0
    %v573 = vadd.f32 %v108, %v572
    %574 = vmatmul.f32.gmra.mxu0 %v319
    %v575 = vpop.f32.mrf.mxu0
    %v576 = vadd.f32 %v108, %v575
    %577 = vmatmul.f32.gmra.mxu0 %v322
    %v578 = vpop.f32.mrf.mxu0
    %v579 = vadd.f32 %v108, %v578
    %580 = vmatmul.f32.gmra.mxu0 %v325
    %v581 = vpop.f32.mrf.mxu0
    %v582 = vadd.f32 %v108, %v581
    %583 = vmatmul.f32.gmra.mxu0 %v328
    %v584 = vpop.f32.mrf.mxu0
    %v585 = vadd.f32 %v108, %v584
    %586 = vmatmul.f32.gmra.mxu0 %v331
    %v587 = vpop.f32.mrf.mxu0
    %v588 = vadd.f32 %v108, %v587
    %589 = vmatmul.f32.gmra.mxu0 %v334
    %v590 = vpop.f32.mrf.mxu0
    %v591 = vadd.f32 %v108, %v590
    %592 = vmatmul.f32.gmra.mxu0 %v337
    %v593 = vpop.f32.mrf.mxu0
    %v594 = vadd.f32 %v108, %v593
    %595 = vmatmul.f32.gmra.mxu0 %v340
    %v596 = vpop.f32.mrf.mxu0
    %v597 = vadd.f32 %v108, %v596
    %598 = vmatmul.f32.gmra.mxu0 %v343
    %v599 = vpop.f32.mrf.mxu0
    %v600 = vadd.f32 %v108, %v599
    %601 = vmatmul.f32.gmra.mxu0 %v346
    %v602 = vpop.f32.mrf.mxu0
    %v603 = vadd.f32 %v108, %v602
    %604 = vmatmul.f32.gmra.mxu0 %v349
    %v605 = vpop.f32.mrf.mxu0
    %v606 = vadd.f32 %v108, %v605
    %607 = vdwg.mxu0
    %v608 = vmax.f32 %v369, 0.0
    %v609 = vmax.f32 %v372, 0.0
    %v610 = vmax.f32 %v375, 0.0
    %v611 = vmax.f32 %v378, 0.0
    %v612 = vmax.f32 %v381, 0.0
    %v613 = vmax.f32 %v384, 0.0
    %v614 = vmax.f32 %v387, 0.0
    %v615 = vmax.f32 %v390, 0.0
    %v616 = vmax.f32 %v393, 0.0
    %v617 = vmax.f32 %v396, 0.0
    %v618 = vmax.f32 %v399, 0.0
    %v619 = vmax.f32 %v402, 0.0
    %v620 = vmax.f32 %v405, 0.0
    %v621 = vmax.f32 %v408, 0.0
    %v622 = vmax.f32 %v411, 0.0
    %v623 = vmax.f32 %v414, 0.0
    %v624 = vmax.f32 %v417, 0.0
    %v625 = vmax.f32 %v420, 0.0
    %v626 = vmax.f32 %v423, 0.0
    %v627 = vmax.f32 %v426, 0.0
    %v628 = vmax.f32 %v429, 0.0
    %v629 = vmax.f32 %v432, 0.0
    %v630 = vmax.f32 %v435, 0.0
    %v631 = vmax.f32 %v438, 0.0
    %v632 = vmax.f32 %v441, 0.0
    %v633 = vmax.f32 %v444, 0.0
    %v634 = vmax.f32 %v447, 0.0
    %v635 = vmax.f32 %v450, 0.0
    %v636 = vmax.f32 %v453, 0.0
    %v637 = vmax.f32 %v456, 0.0
    %v638 = vmax.f32 %v459, 0.0
    %v639 = vmax.f32 %v462, 0.0
    %v640 = vmax.f32 %v465, 0.0
    %v641 = vmax.f32 %v468, 0.0
    %v642 = vmax.f32 %v471, 0.0
    %v643 = vmax.f32 %v474, 0.0
    %v644 = vmax.f32 %v477, 0.0
    %v645 = vmax.f32 %v480, 0.0
    %v646 = vmax.f32 %v483, 0.0
    %v647 = vmax.f32 %v486, 0.0
    %v648 = vmax.f32 %v489, 0.0
    %v649 = vmax.f32 %v492, 0.0
    %v650 = vmax.f32 %v495, 0.0
    %v651 = vmax.f32 %v498, 0.0
    %v652 = vmax.f32 %v501, 0.0
    %v653 = vmax.f32 %v504, 0.0
    %v654 = vmax.f32 %v507, 0.0
    %v655 = vmax.f32 %v510, 0.0
    %v656 = vmax.f32 %v513, 0.0
    %v657 = vmax.f32 %v516, 0.0
    %v658 = vmax.f32 %v519, 0.0
    %v659 = vmax.f32 %v522, 0.0
    %v660 = vmax.f32 %v525, 0.0
    %v661 = vmax.f32 %v528, 0.0
    %v662 = vmax.f32 %v531, 0.0
    %v663 = vmax.f32 %v534, 0.0
    %v664 = vmax.f32 %v537, 0.0
    %v665 = vmax.f32 %v540, 0.0
    %v666 = vmax.f32 %v543, 0.0
    %v667 = vmax.f32 %v546, 0.0
    %v668 = vmax.f32 %v549, 0.0
    %v669 = vmax.f32 %v552, 0.0
    %v670 = vmax.f32 %v555, 0.0
    %v671 = vmax.f32 %v558, 0.0
    %v672 = vmax.f32 %v561, 0.0
    %v673 = vmax.f32 %v564, 0.0
    %v674 = vmax.f32 %v567, 0.0
    %v675 = vmax.f32 %v570, 0.0
    %v676 = vmax.f32 %v573, 0.0
    %v677 = vmax.f32 %v576, 0.0
    %v678 = vmax.f32 %v579, 0.0
    %v679 = vmax.f32 %v582, 0.0
    %v680 = vmax.f32 %v585, 0.0
    %v681 = vmax.f32 %v588, 0.0
    %v682 = vmax.f32 %v591, 0.0
    %v683 = vmax.f32 %v594, 0.0
    %v684 = vmax.f32 %v597, 0.0
    %v685 = vmax.f32 %v600, 0.0
    %v686 = vmax.f32 %v603, 0.0
    %v687 = vmax.f32 %v606, 0.0
    %v688 = vld [vmem:[%s3] sm:$0x1]
    %s689 = sld [smem:[#allocation2]]
    %v690 = vstv %s689
    %v692 = vsel %vm110, %v688, 0
    %v695 = vsel %vm110, %v608, 0
    %v698 = vsel %vm110, %v609, 0
    %v701 = vsel %vm110, %v610, 0
    %v704 = vsel %vm110, %v611, 0
    %v707 = vsel %vm110, %v612, 0
    %v710 = vsel %vm110, %v613, 0
    %v713 = vsel %vm110, %v614, 0
    %v716 = vsel %vm110, %v615, 0
    %v719 = vsel %vm110, %v616, 0
    %v722 = vsel %vm110, %v617, 0
    %v725 = vsel %vm110, %v618, 0
    %v728 = vsel %vm110, %v619, 0
    %v731 = vsel %vm110, %v620, 0
    %v734 = vsel %vm110, %v621, 0
    %v737 = vsel %vm110, %v622, 0
    %v740 = vsel %vm110, %v623, 0
    %v743 = vsel %vm110, %v624, 0
    %v746 = vsel %vm110, %v625, 0
    %v749 = vsel %vm110, %v626, 0
    %v752 = vsel %vm110, %v627, 0
    %v755 = vsel %vm110, %v628, 0
    %v758 = vsel %vm110, %v629, 0
    %v761 = vsel %vm110, %v630, 0
    %v764 = vsel %vm110, %v631, 0
    %v767 = vsel %vm110, %v632, 0
    %v770 = vsel %vm110, %v633, 0
    %v773 = vsel %vm110, %v634, 0
    %v776 = vsel %vm110, %v635, 0
    %v779 = vsel %vm110, %v636, 0
    %v782 = vsel %vm110, %v637, 0
    %v785 = vsel %vm110, %v638, 0
    %v788 = vsel %vm110, %v639, 0
    %v791 = vsel %vm110, %v640, 0
    %v794 = vsel %vm110, %v641, 0
    %v797 = vsel %vm110, %v642, 0
    %v800 = vsel %vm110, %v643, 0
    %v803 = vsel %vm110, %v644, 0
    %v806 = vsel %vm110, %v645, 0
    %v809 = vsel %vm110, %v646, 0
    %v812 = vsel %vm110, %v647, 0
    %v815 = vsel %vm110, %v648, 0
    %v818 = vsel %vm110, %v649, 0
    %v821 = vsel %vm110, %v650, 0
    %v824 = vsel %vm110, %v651, 0
    %v827 = vsel %vm110, %v652, 0
    %v830 = vsel %vm110, %v653, 0
    %v833 = vsel %vm110, %v654, 0
    %v836 = vsel %vm110, %v655, 0
    %v839 = vsel %vm110, %v656, 0
    %v842 = vsel %vm110, %v657, 0
    %v845 = vsel %vm110, %v658, 0
    %v848 = vsel %vm110, %v659, 0
    %v851 = vsel %vm110, %v660, 0
    %v854 = vsel %vm110, %v661, 0
    %v857 = vsel %vm110, %v662, 0
    %v860 = vsel %vm110, %v663, 0
    %v863 = vsel %vm110, %v664, 0
    %v866 = vsel %vm110, %v665, 0
    %v869 = vsel %vm110, %v666, 0
    %v872 = vsel %vm110, %v667, 0
    %v875 = vsel %vm110, %v668, 0
    %v878 = vsel %vm110, %v669, 0
    %v881 = vsel %vm110, %v670, 0
    %v884 = vsel %vm110, %v671, 0
    %v887 = vsel %vm110, %v672, 0
    %v890 = vsel %vm110, %v673, 0
    %v893 = vsel %vm110, %v674, 0
    %v896 = vsel %vm110, %v675, 0
    %v899 = vsel %vm110, %v676, 0
    %v902 = vsel %vm110, %v677, 0
    %v905 = vsel %vm110, %v678, 0
    %v908 = vsel %vm110, %v679, 0
    %v911 = vsel %vm110, %v680, 0
    %v914 = vsel %vm110, %v681, 0
    %v917 = vsel %vm110, %v682, 0
    %v920 = vsel %vm110, %v683, 0
    %v923 = vsel %vm110, %v684, 0
    %v926 = vsel %vm110, %v685, 0
    %v929 = vsel %vm110, %v686, 0
    %v932 = vsel %vm110, %v687, 0
    %934 = vmatpush.xpose.msra.mxu0 %v740
    %935 = vmatpush.xpose.msra.mxu0 %v737
    %936 = vmatpush.xpose.msra.mxu0 %v734
    %937 = vmatpush.xpose.msra.mxu0 %v731
    %938 = vmatpush.xpose.msra.mxu0 %v728
    %939 = vmatpush.xpose.msra.mxu0 %v725
    %940 = vmatpush.xpose.msra.mxu0 %v722
    %941 = vmatpush.xpose.msra.mxu0 %v719
    %942 = vmatpush.xpose.msra.mxu0 %v716
    %943 = vmatpush.xpose.msra.mxu0 %v713
    %944 = vmatpush.xpose.msra.mxu0 %v710
    %945 = vmatpush.xpose.msra.mxu0 %v707
    %946 = vmatpush.xpose.msra.mxu0 %v704
    %947 = vmatpush.xpose.msra.mxu0 %v701
    %948 = vmatpush.xpose.msra.mxu0 %v698
    %949 = vmatpush.xpose.msra.mxu0 %v695
    %950 = vmatmul.f32.gmra.mxu0 %v692
    %v951 = vpop.f32.mrf.mxu0
    %v952 = vadd.f32 %v690, %v951
    %953 = vdwg.mxu0
    %954 = vmatpush.xpose.msra.mxu0 %v788
    %955 = vmatpush.xpose.msra.mxu0 %v785
    %956 = vmatpush.xpose.msra.mxu0 %v782
    %957 = vmatpush.xpose.msra.mxu0 %v779
    %958 = vmatpush.xpose.msra.mxu0 %v776
    %959 = vmatpush.xpose.msra.mxu0 %v773
    %960 = vmatpush.xpose.msra.mxu0 %v770
    %961 = vmatpush.xpose.msra.mxu0 %v767
    %962 = vmatpush.xpose.msra.mxu0 %v764
    %963 = vmatpush.xpose.msra.mxu0 %v761
    %964 = vmatpush.xpose.msra.mxu0 %v758
    %965 = vmatpush.xpose.msra.mxu0 %v755
    %966 = vmatpush.xpose.msra.mxu0 %v752
    %967 = vmatpush.xpose.msra.mxu0 %v749
    %968 = vmatpush.xpose.msra.mxu0 %v746
    %969 = vmatpush.xpose.msra.mxu0 %v743
    %970 = vmatmul.f32.gmra.mxu0 %v692
    %v971 = vpop.f32.mrf.mxu0
    %v972 = vadd.f32 %v690, %v971
    %973 = vdwg.mxu0
    %974 = vmatpush.xpose.msra.mxu0 %v836
    %975 = vmatpush.xpose.msra.mxu0 %v833
    %976 = vmatpush.xpose.msra.mxu0 %v830
    %977 = vmatpush.xpose.msra.mxu0 %v827
    %978 = vmatpush.xpose.msra.mxu0 %v824
    %979 = vmatpush.xpose.msra.mxu0 %v821
    %980 = vmatpush.xpose.msra.mxu0 %v818
    %981 = vmatpush.xpose.msra.mxu0 %v815
    %982 = vmatpush.xpose.msra.mxu0 %v812
    %983 = vmatpush.xpose.msra.mxu0 %v809
    %984 = vmatpush.xpose.msra.mxu0 %v806
    %985 = vmatpush.xpose.msra.mxu0 %v803
    %986 = vmatpush.xpose.msra.mxu0 %v800
    %987 = vmatpush.xpose.msra.mxu0 %v797
    %988 = vmatpush.xpose.msra.mxu0 %v794
    %989 = vmatpush.xpose.msra.mxu0 %v791
    %990 = vmatmul.f32.gmra.mxu0 %v692
    %v991 = vpop.f32.mrf.mxu0
    %v992 = vadd.f32 %v690, %v991
    %993 = vdwg.mxu0
    %994 = vmatpush.xpose.msra.mxu0 %v884
    %995 = vmatpush.xpose.msra.mxu0 %v881
    %996 = vmatpush.xpose.msra.mxu0 %v878
    %997 = vmatpush.xpose.msra.mxu0 %v875
    %998 = vmatpush.xpose.msra.mxu0 %v872
    %999 = vmatpush.xpose.msra.mxu0 %v869
    %1000 = vmatpush.xpose.msra.mxu0 %v866
    %1001 = vmatpush.xpose.msra.mxu0 %v863
    %1002 = vmatpush.xpose.msra.mxu0 %v860
    %1003 = vmatpush.xpose.msra.mxu0 %v857
    %1004 = vmatpush.xpose.msra.mxu0 %v854
    %1005 = vmatpush.xpose.msra.mxu0 %v851
    %1006 = vmatpush.xpose.msra.mxu0 %v848
    %1007 = vmatpush.xpose.msra.mxu0 %v845
    %1008 = vmatpush.xpose.msra.mxu0 %v842
    %1009 = vmatpush.xpose.msra.mxu0 %v839
    %1010 = vmatmul.f32.gmra.mxu0 %v692
    %v1011 = vpop.f32.mrf.mxu0
    %v1012 = vadd.f32 %v690, %v1011
    %1013 = vdwg.mxu0
    %1014 = vmatpush.xpose.msra.mxu0 %v932
    %1015 = vmatpush.xpose.msra.mxu0 %v929
    %1016 = vmatpush.xpose.msra.mxu0 %v926
    %1017 = vmatpush.xpose.msra.mxu0 %v923
    %1018 = vmatpush.xpose.msra.mxu0 %v920
    %1019 = vmatpush.xpose.msra.mxu0 %v917
    %1020 = vmatpush.xpose.msra.mxu0 %v914
    %1021 = vmatpush.xpose.msra.mxu0 %v911
    %1022 = vmatpush.xpose.msra.mxu0 %v908
    %1023 = vmatpush.xpose.msra.mxu0 %v905
    %1024 = vmatpush.xpose.msra.mxu0 %v902
    %1025 = vmatpush.xpose.msra.mxu0 %v899
    %1026 = vmatpush.xpose.msra.mxu0 %v896
    %1027 = vmatpush.xpose.msra.mxu0 %v893
    %1028 = vmatpush.xpose.msra.mxu0 %v890
    %1029 = vmatpush.xpose.msra.mxu0 %v887
    %1030 = vmatmul.f32.gmra.mxu0 %v692
    %v1031 = vpop.f32.mrf.mxu0
    %v1032 = vadd.f32 %v690, %v1031
    %1033 = vdwg.mxu0
    %s1034 = smul.u32 0, 640
    %v1035 = vlaneseq
    %v1036 = vand.u32 %v1035, 127
    %v1037 = vadd.s32 %v1036, 128
    %v1038 = vadd.s32 %v1036, 256
    %v1039 = vadd.s32 %v1036, 384
    %v1040 = vadd.s32 %v1036, 512
    %v1041 = vstv %s1034
    %v1042 = vadd.s32 %v1041, %v1036
    %v1043 = vadd.s32 %v1041, %v1037
    %v1044 = vadd.s32 %v1041, %v1038
    %v1045 = vadd.s32 %v1041, %v1039
    %v1046 = vadd.s32 %v1041, %v1040
    %vm1047 = vcmp.lt.s32.totalorder %v1042, 600
    %vm1048 = vcmp.lt.s32.totalorder %v1043, 600
    %vm1049 = vcmp.lt.s32.totalorder %v1044, 600
    %vm1050 = vcmp.lt.s32.totalorder %v1045, 600
    %vm1051 = vcmp.lt.s32.totalorder %v1046, 600
    %v1052 = vsel %vm1047, %v952, 0.0
    %v1053 = vsel %vm1048, %v972, 0.0
    %v1054 = vsel %vm1049, %v992, 0.0
    %v1055 = vsel %vm1050, %v1012, 0.0
    %v1056 = vsel %vm1051, %v1032, 0.0
    %v1062 = vrot.slane %v1053, 7
    %v1063 = vrot.slane %v1054, 6
    %v1064 = vrot.slane %v1055, 5
    %v1065 = vrot.slane %v1056, 4
    %vm1066 = vcmask 1040384
    %v1067 = vsel %vm1066, %v1052, %v1062
    %vm1068 = vcmask 1041408
    %v1069 = vsel %vm1068, %v1067, %v1063
    %vm1070 = vcmask 1043459
    %v1071 = vsel %vm1070, %v1064, %v1065
    %vm1072 = vcmask 1042432
    %v1073 = vsel %vm1072, %v1069, %v1071
    %v1075 = vlaneseq
    %vm1076 = vcmp.ge.s32.totalorder %v1075, 0
    %vm1077 = vcmp.lt.s32.totalorder %v1075, 640
    %vm1078 = vmand %vm1076, %vm1077
    %1079 = vst.msk [vmem:[#allocation3] sm:$0x1f] %vm1078, %v1073
    // Predicated region
    $region22: #{tpu_custom_call.1} parent=1 // pred_check
      _
    $region23: #{tpu_custom_call.1} parent=1 // pred_check_branch
      %1081 = sbr.rel (0) target = $region25
    $region24: #{tpu_custom_call.1} parent=1 // pred_region
      %1083 = vsyncadd [#allocation4], 0
      %s1085 = sshll.u32 [#allocation3], 4
      %s1086 = int_to_ptr.vmem [resolvable:$true] %s1085
      %s1087 = sshll.u32 %s5, 4
      %s1088 = int_to_ptr.hbm [resolvable:$true] %s1087
      %1090 = dma.vmem_to_hbm [thread:$0]  %s1086, 80, %s1088, [#allocation4]
    $region25: #{tpu_custom_call.1} parent=1 // pred_fallthru
      _
    // Predicated region
    $region26: #{tpu_custom_call.1} parent=1 // pred_check
      _
    $region27: #{tpu_custom_call.1} parent=1 // pred_check_branch
      %1092 = sbr.rel (0) target = $region29
    $region28: #{tpu_custom_call.1} parent=1 // pred_region
      %1094 = dma.done [#allocation4], 80
    $region29: #{tpu_custom_call.1} parent=1 // pred_fallthru
      _
    %1095 = vsyncpa [#allocation4], 1

</llo_original>
